<compile_context>
chip_gen: v7x
topology: tpu7x:2x2x1
jax: 0.10.0
libtpu: 0.0.40
codegen_flags: <defaults>
</compile_context>

<pallas_src>
import functools

import jax
import jax.numpy as jnp
from jax import lax
from jax.experimental import pallas as pl
from jax.experimental.pallas import tpu as pltpu


def _act(x):
    # ReLU activation (see NOTE above).
    return jnp.maximum(x, 0.0)


def _gat_kernel(h_ref, wt_ref, v12_ref, o_ref, *, bt, n, mxu_dtype):
    """One grid step = one group of `bt` batch elements.

    h_ref  : (bt*n, H)   node features of the batch group (batch-major rows)
    wt_ref : (H, H)      W^T  (so h @ wt == nn.Linear(W)(h))
    v12_ref: (2, H)      row 0 = W^T a[:H] (f_i), row 1 = W^T a[H:] (f_j)
    o_ref  : (n, bt*H)   per-batch outputs packed along lanes (lane-dense)
    """
    h2 = h_ref[...].astype(mxu_dtype)                 # (bt*n, H)
    wt = wt_ref[...].astype(mxu_dtype)                # (H, H)
    v12 = v12_ref[...].astype(mxu_dtype)              # (2, H)

    # Shared projection for the whole group: ONE MXU matmul with M = bt*n.
    hw = jnp.dot(h2, wt, preferred_element_type=jnp.float32)       # (bt*n, H)
    hw_m = hw.astype(mxu_dtype)

    # Group-level attention scores (hoisted out of the per-batch loop):
    #   f_i_all[r, 0] = h[r] . v1   (column form)
    #   f_j_all[0, r] = h[r] . v2   (row form -> no XLU transpose per batch)
    f_i_all = lax.dot_general(h2, v12[0:1, :], (((1,), (1,)), ((), ())),
                              preferred_element_type=jnp.float32)   # (bt*n, 1)
    f_j_all = lax.dot_general(v12[1:2, :], h2, (((1,), (1,)), ((), ())),
                              preferred_element_type=jnp.float32)   # (1, bt*n)

    outs = []
    for b in range(bt):                               # static, fully unrolled
        lo = b * n
        f_i = f_i_all[lo:lo + n, :]                   # (n, 1) sublane slice
        f_j = f_j_all[:, lo:lo + n]                   # (1, n) lane slice

        # e_ij = act(hw_i . a1 + hw_j . a2) = act(h_i . v1 + h_j . v2)
        e = _act(f_i + f_j)                           # (n, n), e[i, j]

        # softmax over j (torch dim=2 == last axis), max-subtracted
        m = jnp.max(e, axis=-1, keepdims=True)
        p = jnp.exp(e - m)
        denom = jnp.sum(p, axis=-1, keepdims=True)    # >= 1 (exp(0) term)
        r = pl.reciprocal(denom, approx=True)         # EUP vrcp (free slot)
        r = r * (2.0 - denom * r)                     # one Newton step -> ~exact

        # Aggregate first, normalize after:
        #   relu((p * r) @ hw) == relu(p @ hw) * r   since r > 0.
        agg = jnp.dot(p.astype(mxu_dtype), hw_m[lo:lo + n, :],
                      preferred_element_type=jnp.float32)           # (n, H)
        outs.append(_act(agg) * r)

    # Single lane-packed store (bt*H lanes wide); wrapper unpacks.
    o_ref[...] = jnp.concatenate(outs, axis=-1).astype(o_ref.dtype)


def graph_attentional_layer(h, W, a_vec, *, use_bf16_mxu=False):
    """h: (B, N, H) f32, W: (H, H) nn.Linear weight (y = x @ W^T), a_vec: (2H,)."""
    B, N, H = h.shape

    # Batches packed per grid step:
    #   * lane-density target: bt*H >= 128 (dense vst for the packed output)
    #   * MXU-row target:      bt*N >= 256 (v6e/v7x MXU height), capped at 8
    #     to bound the unrolled loop / VMEM
    #   * capped at the real B so small batches never compute zero padding
    bt_lanes = pl.cdiv(128, H)
    bt_rows = min(pl.cdiv(256, N), 8)
    bt = min(B, max(bt_lanes, bt_rows))
    b_pad = pl.cdiv(B, bt) * bt
    num_groups = b_pad // bt
    if num_groups > 1 and (bt * N) % 8 != 0:
        # Fall back to a single full-extent block so the (8,128) block-shape
        # divisibility constraint is vacuous.
        bt, b_pad, num_groups = B, B, 1

    hf = h.astype(jnp.float32)
    if b_pad != B:
        hf = jnp.pad(hf, ((0, b_pad - B), (0, 0), (0, 0)))
    h2d = hf.reshape(b_pad * N, H)                    # batch-major rows

    wt = W.astype(jnp.float32).T                      # x @ wt == nn.Linear(W)(x)
    a_f = a_vec.astype(jnp.float32)
    v12 = jnp.stack([wt @ a_f[:H], wt @ a_f[H:]], axis=0)   # (2, H)

    mxu_dtype = jnp.bfloat16 if use_bf16_mxu else jnp.float32
    kernel = functools.partial(_gat_kernel, bt=bt, n=N, mxu_dtype=mxu_dtype)

    out_packed = pl.pallas_call(
        kernel,
        out_shape=jax.ShapeDtypeStruct((num_groups, N, bt * H), jnp.float32),
        grid_spec=pltpu.PrefetchScalarGridSpec(
            num_scalar_prefetch=0,
            grid=(num_groups,),
            in_specs=[
                pl.BlockSpec((bt * N, H), lambda g: (g, 0)),   # batch-group rows
                pl.BlockSpec((H, H), lambda g: (0, 0)),        # W^T (resident)
                pl.BlockSpec((2, H), lambda g: (0, 0)),        # [v1; v2]
            ],
            out_specs=pl.BlockSpec((None, N, bt * H), lambda g: (g, 0, 0)),
        ),
        compiler_params=pltpu.CompilerParams(
            dimension_semantics=("parallel",),
            vmem_limit_bytes=32 * 1024 * 1024,
        ),
    )(h2d, wt, v12)

    # Unpack lanes -> (b_pad, N, H), drop any batch padding.
    out = (out_packed.reshape(num_groups, N, bt, H)
           .transpose(0, 2, 1, 3)
           .reshape(b_pad, N, H))
    return out[:B]


def graph_attentional_layer_ref(h, W, a_vec):
    """Pure-JAX reference mirroring the PyTorch forward exactly."""
    B, N, H = h.shape
    hw = jnp.einsum("bnh,oh->bno", h, W)                    # nn.Linear: x @ W^T
    h_i = jnp.broadcast_to(hw[:, :, None, :], (B, N, N, H))
    h_j = jnp.broadcast_to(hw[:, None, :, :], (B, N, N, H))
    h_cat = jnp.concatenate([h_i, h_j], axis=3)             # (B, N, N, 2H)
    e = _act(jnp.sum(h_cat * a_vec.reshape(1, 1, 1, 2 * H), axis=3))
    a_ij = jax.nn.softmax(e, axis=2)
    return _act(jnp.einsum("bij,bjh->bih", a_ij, hw))


if __name__ == "__main__":
    B, N, H = 2, 8, 32

    key = jax.random.PRNGKey(0)
    k_h, k_w, k_a = jax.random.split(key, 3)

    h = jax.random.normal(k_h, (B, N, H), dtype=jnp.float32)

    # nn.Linear(hidden, hidden, bias=False) weight: (H, H)
    W = jax.random.normal(k_w, (H, H), dtype=jnp.float32) * (1.0 / jnp.sqrt(H))

    # self.a: (1, 1, 1, 2H) with xavier_normal init -> std = sqrt(2/(1+2H))
    a_std = jnp.sqrt(2.0 / (1.0 + 2.0 * H))
    a_vec = jax.random.normal(k_a, (2 * H,), dtype=jnp.float32) * a_std

    # Check 1: small batch (no zero-padded batches, single group).
    out = jax.block_until_ready(graph_attentional_layer(h, W, a_vec))
    ref = graph_attentional_layer_ref(h, W, a_vec)
    assert out.shape == (B, N, H)
    assert jnp.allclose(out, ref, atol=1e-3, rtol=1e-3), (
        f"max abs err {jnp.max(jnp.abs(out - ref))}"
    )

    # Check 2: larger batch packed into one group with no padding (bt = 6).
    B2 = 6
    h_big = jax.random.normal(jax.random.PRNGKey(1), (B2, N, H), dtype=jnp.float32)
    out2 = jax.block_until_ready(graph_attentional_layer(h_big, W, a_vec))
    ref2 = graph_attentional_layer_ref(h_big, W, a_vec)
    assert jnp.allclose(out2, ref2, atol=1e-3, rtol=1e-3), (
        f"max abs err {jnp.max(jnp.abs(out2 - ref2))}"
    )

    # Check 3: multi-group grid path with batch padding (B=10 -> bt=8, 2 groups).
    B3 = 10
    h_multi = jax.random.normal(jax.random.PRNGKey(2), (B3, N, H), dtype=jnp.float32)
    out3 = jax.block_until_ready(graph_attentional_layer(h_multi, W, a_vec))
    ref3 = graph_attentional_layer_ref(h_multi, W, a_vec)
    assert jnp.allclose(out3, ref3, atol=1e-3, rtol=1e-3), (
        f"max abs err {jnp.max(jnp.abs(out3 - ref3))}"
    )

    # Check 4: bf16 MXU-operand path (loose tolerance, bf16 rel err ~4e-3).
    out_bf = jax.block_until_ready(
        graph_attentional_layer(h, W, a_vec, use_bf16_mxu=True))
    assert jnp.allclose(out_bf, ref, atol=1e-1, rtol=1e-1), (
        f"max abs err {jnp.max(jnp.abs(out_bf - ref))}"
    )

    print("KERNEL_OK")
</pallas_src>

<mosaic_0001>
module attributes {stable_mosaic.version = 11 : i64} {
  func.func @_gat_kernel(%arg0: i32, %arg1: memref<16x32xf32, #tpu.memory_space<vmem>>, %arg2: memref<32x32xf32, #tpu.memory_space<vmem>>, %arg3: memref<2x32xf32, #tpu.memory_space<vmem>>, %arg4: memref<1x8x64xf32, #tpu.memory_space<vmem>>) attributes {dimension_semantics = [#tpu.dimension_semantics<parallel>], iteration_bounds = array<i64: 1>, scalar_prefetch = 0 : i64, scratch_operands = 0 : i64, tpu.core_type = #tpu.core_type<tc>, window_params = [{transform_indices = @transform_0, window_bounds = array<i64: 16, 32>}, {pipeline_mode = #tpu.pipeline_mode<synchronous>, transform_indices = @transform_1, window_bounds = array<i64: 32, 32>}, {pipeline_mode = #tpu.pipeline_mode<synchronous>, transform_indices = @transform_2, window_bounds = array<i64: 2, 32>}, {transform_indices = @transform_3, window_bounds = array<i64: 1, 8, 64>}]} {
    %c0 = arith.constant 0 : index
    %c0_0 = arith.constant 0 : index
    %0 = vector.load %arg1[%c0, %c0_0] : memref<16x32xf32, #tpu.memory_space<vmem>>, vector<16x32xf32>
    %c0_1 = arith.constant 0 : index
    %c0_2 = arith.constant 0 : index
    %1 = vector.load %arg2[%c0_1, %c0_2] : memref<32x32xf32, #tpu.memory_space<vmem>>, vector<32x32xf32>
    %c0_3 = arith.constant 0 : index
    %c0_4 = arith.constant 0 : index
    %2 = vector.load %arg3[%c0_3, %c0_4] : memref<2x32xf32, #tpu.memory_space<vmem>>, vector<2x32xf32>
    %cst = arith.constant dense<0.000000e+00> : vector<16x32xf32>
    %3 = tpu.matmul %0, %1, %cst {dimension_numbers = #tpu.dot_dimension_numbers<[1], [0], [0], [1], [0, 0, 1, 1], [], []>} : vector<16x32xf32>, vector<32x32xf32>, vector<16x32xf32> -> vector<16x32xf32>
    %4 = vector.extract_strided_slice %2 {offsets = [0, 0], sizes = [1, 32], strides = [1, 1]} : vector<2x32xf32> to vector<1x32xf32>
    %cst_5 = arith.constant dense<0.000000e+00> : vector<16x1xf32>
    %5 = tpu.matmul %0, %4, %cst_5 {dimension_numbers = #tpu.dot_dimension_numbers<[1], [1], [0], [0], [0, 0, 1, 0], [], []>} : vector<16x32xf32>, vector<1x32xf32>, vector<16x1xf32> -> vector<16x1xf32>
    %6 = vector.extract_strided_slice %2 {offsets = [1, 0], sizes = [1, 32], strides = [1, 1]} : vector<2x32xf32> to vector<1x32xf32>
    %cst_6 = arith.constant dense<0.000000e+00> : vector<1x16xf32>
    %7 = tpu.matmul %6, %0, %cst_6 {dimension_numbers = #tpu.dot_dimension_numbers<[1], [1], [0], [0], [0, 0, 1, 0], [], []>} : vector<1x32xf32>, vector<16x32xf32>, vector<1x16xf32> -> vector<1x16xf32>
    %8 = vector.extract_strided_slice %5 {offsets = [0, 0], sizes = [8, 1], strides = [1, 1]} : vector<16x1xf32> to vector<8x1xf32>
    %9 = vector.extract_strided_slice %7 {offsets = [0, 0], sizes = [1, 8], strides = [1, 1]} : vector<1x16xf32> to vector<1x8xf32>
    %10 = vector.broadcast %8 : vector<8x1xf32> to vector<8x8xf32>
    %11 = vector.broadcast %9 : vector<1x8xf32> to vector<8x8xf32>
    %12 = arith.addf %10, %11 : vector<8x8xf32>
    %cst_7 = arith.constant 0.000000e+00 : f32
    %13 = vector.broadcast %cst_7 : f32 to vector<8x8xf32>
    %14 = arith.maximumf %12, %13 : vector<8x8xf32>
    %cst_8 = arith.constant dense<0xFF800000> : vector<8xf32>
    %15 = vector.multi_reduction <maximumf>, %14, %cst_8 [1] : vector<8x8xf32> to vector<8xf32>
    %16 = vector.shape_cast %15 : vector<8xf32> to vector<8x1xf32>
    %17 = vector.broadcast %16 : vector<8x1xf32> to vector<8x8xf32>
    %18 = arith.subf %14, %17 : vector<8x8xf32>
    %19 = math.exp %18 : vector<8x8xf32>
    %cst_9 = arith.constant dense<0.000000e+00> : vector<8xf32>
    %20 = vector.multi_reduction <add>, %19, %cst_9 [1] : vector<8x8xf32> to vector<8xf32>
    %21 = vector.shape_cast %20 : vector<8xf32> to vector<8x1xf32>
    %22 = tpu.reciprocal %21 {approx = true} : vector<8x1xf32> -> vector<8x1xf32>
    %23 = arith.mulf %21, %22 : vector<8x1xf32>
    %cst_10 = arith.constant 2.000000e+00 : f32
    %24 = vector.broadcast %cst_10 : f32 to vector<8x1xf32>
    %25 = arith.subf %24, %23 : vector<8x1xf32>
    %26 = arith.mulf %22, %25 : vector<8x1xf32>
    %27 = vector.extract_strided_slice %3 {offsets = [0, 0], sizes = [8, 32], strides = [1, 1]} : vector<16x32xf32> to vector<8x32xf32>
    %cst_11 = arith.constant dense<0.000000e+00> : vector<8x32xf32>
    %28 = tpu.matmul %19, %27, %cst_11 {dimension_numbers = #tpu.dot_dimension_numbers<[1], [0], [0], [1], [0, 0, 1, 1], [], []>} : vector<8x8xf32>, vector<8x32xf32>, vector<8x32xf32> -> vector<8x32xf32>
    %cst_12 = arith.constant 0.000000e+00 : f32
    %29 = vector.broadcast %cst_12 : f32 to vector<8x32xf32>
    %30 = arith.maximumf %28, %29 : vector<8x32xf32>
    %31 = vector.broadcast %26 : vector<8x1xf32> to vector<8x32xf32>
    %32 = arith.mulf %30, %31 : vector<8x32xf32>
    %33 = vector.extract_strided_slice %5 {offsets = [8, 0], sizes = [8, 1], strides = [1, 1]} : vector<16x1xf32> to vector<8x1xf32>
    %34 = vector.extract_strided_slice %7 {offsets = [0, 8], sizes = [1, 8], strides = [1, 1]} : vector<1x16xf32> to vector<1x8xf32>
    %35 = vector.broadcast %33 : vector<8x1xf32> to vector<8x8xf32>
    %36 = vector.broadcast %34 : vector<1x8xf32> to vector<8x8xf32>
    %37 = arith.addf %35, %36 : vector<8x8xf32>
    %cst_13 = arith.constant 0.000000e+00 : f32
    %38 = vector.broadcast %cst_13 : f32 to vector<8x8xf32>
    %39 = arith.maximumf %37, %38 : vector<8x8xf32>
    %cst_14 = arith.constant dense<0xFF800000> : vector<8xf32>
    %40 = vector.multi_reduction <maximumf>, %39, %cst_14 [1] : vector<8x8xf32> to vector<8xf32>
    %41 = vector.shape_cast %40 : vector<8xf32> to vector<8x1xf32>
    %42 = vector.broadcast %41 : vector<8x1xf32> to vector<8x8xf32>
    %43 = arith.subf %39, %42 : vector<8x8xf32>
    %44 = math.exp %43 : vector<8x8xf32>
    %cst_15 = arith.constant dense<0.000000e+00> : vector<8xf32>
    %45 = vector.multi_reduction <add>, %44, %cst_15 [1] : vector<8x8xf32> to vector<8xf32>
    %46 = vector.shape_cast %45 : vector<8xf32> to vector<8x1xf32>
    %47 = tpu.reciprocal %46 {approx = true} : vector<8x1xf32> -> vector<8x1xf32>
    %48 = arith.mulf %46, %47 : vector<8x1xf32>
    %cst_16 = arith.constant 2.000000e+00 : f32
    %49 = vector.broadcast %cst_16 : f32 to vector<8x1xf32>
    %50 = arith.subf %49, %48 : vector<8x1xf32>
    %51 = arith.mulf %47, %50 : vector<8x1xf32>
    %52 = vector.extract_strided_slice %3 {offsets = [8, 0], sizes = [8, 32], strides = [1, 1]} : vector<16x32xf32> to vector<8x32xf32>
    %cst_17 = arith.constant dense<0.000000e+00> : vector<8x32xf32>
    %53 = tpu.matmul %44, %52, %cst_17 {dimension_numbers = #tpu.dot_dimension_numbers<[1], [0], [0], [1], [0, 0, 1, 1], [], []>} : vector<8x8xf32>, vector<8x32xf32>, vector<8x32xf32> -> vector<8x32xf32>
    %cst_18 = arith.constant 0.000000e+00 : f32
    %54 = vector.broadcast %cst_18 : f32 to vector<8x32xf32>
    %55 = arith.maximumf %53, %54 : vector<8x32xf32>
    %56 = vector.broadcast %51 : vector<8x1xf32> to vector<8x32xf32>
    %57 = arith.mulf %55, %56 : vector<8x32xf32>
    %58 = tpu.concatenate %32, %57 in 1 : vector<8x32xf32>, vector<8x32xf32> -> vector<8x64xf32>
    %c0_19 = arith.constant 0 : index
    %c0_20 = arith.constant 0 : index
    %c0_21 = arith.constant 0 : index
    %59 = vector.load %arg4[%c0_19, %c0_20, %c0_21] : memref<1x8x64xf32, #tpu.memory_space<vmem>>, vector<1x8x64xf32>
    %60 = vector.shape_cast %59 : vector<1x8x64xf32> to vector<8x64xf32>
    %61 = vector.shape_cast %58 : vector<8x64xf32> to vector<1x8x64xf32>
    tpu.vector_store %arg4[%c0_19, %c0_20, %c0_21], %61 {strides = array<i32>} : memref<1x8x64xf32, #tpu.memory_space<vmem>>, vector<1x8x64xf32>,
    return
  }
  func.func @transform_0(%arg0: i32) -> (i32, i32) {
    %c0_i32 = arith.constant 0 : i32
    %c0_i32_0 = arith.constant 0 : i32
    return %arg0, %c0_i32 : i32, i32
  }
  func.func @transform_1(%arg0: i32) -> (i32, i32) {
    %c0_i32 = arith.constant 0 : i32
    %c0_i32_0 = arith.constant 0 : i32
    %c0_i32_1 = arith.constant 0 : i32
    return %c0_i32, %c0_i32_0 : i32, i32
  }
  func.func @transform_2(%arg0: i32) -> (i32, i32) {
    %c0_i32 = arith.constant 0 : i32
    %c0_i32_0 = arith.constant 0 : i32
    %c0_i32_1 = arith.constant 0 : i32
    return %c0_i32, %c0_i32_0 : i32, i32
  }
  func.func @transform_3(%arg0: i32) -> (i32, i32, i32) {
    %c0_i32 = arith.constant 0 : i32
    %c0_i32_0 = arith.constant 0 : i32
    %c0_i32_1 = arith.constant 0 : i32
    return %arg0, %c0_i32, %c0_i32_0 : i32, i32, i32
  }
}

</mosaic_0001>

<llo_original>
// kernel: tpu_custom_call.1
$region0: #{tpu_custom_call.1}
  #allocation0 [shape = 'u32[]', space=smem, size = 0x4, offset = 0x4, fixed_abs, tag = 'smem constant byte address 0x4 - core index']
  #allocation1 [shape = 'u32[144,128]{1,0:T(1,128)}', space=vmem, size = 0x12000, scoped, tag = 'internal scratch']
  %s0 = inlined_call_operand.hbm [shape: f32[16,32], index: 0, kind: input, shape index: {}]
  %s1 = inlined_call_operand.hbm [shape: f32[32,32], index: 1, kind: input, shape index: {}]
  %s2 = inlined_call_operand.vmem [shape: f32[2,32], index: 2, kind: input, shape index: {}]
  %s3 = inlined_call_operand.hbm [shape: f32[1,8,64], index: 3, kind: output, shape index: {}]
  %s4 = sld [smem:[#allocation0]]
  $region30: #{tpu_custom_call.1} parent=0
    _
  %s6 = ssub.s32 1, %s4
  %s7 = scalar_select 0, %s6, %s4
  $region1: #{tpu_custom_call.1} parent=0
    #allocation2 [shape = 'u8[8192]{0}', space=vmem, size = 0x2000, scoped, tag = 'input window, operand 0, single buffered']
    #allocation3 [shape = 's32[1]{0}', space=sflag, size = 0x4, scoped, tag = 'scoped memory for tpu_custom_call.1']
    #allocation4 [shape = 's32[1]{0}', space=sflag, size = 0x4, scoped, tag = 'scoped memory for tpu_custom_call.1']
    #allocation5 [shape = 'u8[16384]{0}', space=vmem, size = 0x4000, scoped, tag = 'input window, operand 1, single buffered']
    #allocation6 [shape = 's32[1]{0}', space=sflag, size = 0x4, scoped, tag = 'scoped memory for tpu_custom_call.1']
    #allocation7 [shape = 'u8[4096]{0}', space=vmem, size = 0x1000, scoped, tag = 'output window, operand 0, single buffered']
    %8 = vsyncpa [#allocation3], 0
    %9 = vsyncpa [#allocation6], 0
    %10 = vsyncpa [#allocation4], 0
    // Predicated region
    $region2: #{tpu_custom_call.1} parent=1 // pred_check
      _
    $region3: #{tpu_custom_call.1} parent=1 // pred_check_branch
      %12 = sbr.rel (0) target = $region5
    $region4: #{tpu_custom_call.1} parent=1 // pred_region
      %s14 = ssub.s32 256, 256
      %15 = vsyncadd [#allocation3], %s14
      %s16 = sshll.u32 [#allocation2], 4
      %s17 = int_to_ptr.vmem [resolvable:$true] %s16
      %22 = dma.hbm_to_vmem [thread:$0]  %s0, 256, %s17, [#allocation3], 128, 128, 8
    $region5: #{tpu_custom_call.1} parent=1 // pred_fallthru
      _
    // Predicated region
    $region6: #{tpu_custom_call.1} parent=1 // pred_check
      _
    $region7: #{tpu_custom_call.1} parent=1 // pred_check_branch
      %24 = sbr.rel (0) target = $region9
    $region8: #{tpu_custom_call.1} parent=1 // pred_region
      %s26 = ssub.s32 512, 512
      %27 = vsyncadd [#allocation6], %s26
      %s28 = sshll.u32 [#allocation5], 4
      %s29 = int_to_ptr.vmem [resolvable:$true] %s28
      %34 = dma.hbm_to_vmem [thread:$0]  %s1, 512, %s29, [#allocation6], 128, 128, 8
    $region9: #{tpu_custom_call.1} parent=1 // pred_fallthru
      _
    // Predicated region
    $region10: #{tpu_custom_call.1} parent=1 // pred_check
      _
    $region11: #{tpu_custom_call.1} parent=1 // pred_check_branch
      %36 = sbr.rel (0) target = $region13
    $region12: #{tpu_custom_call.1} parent=1 // pred_region
      _
    $region13: #{tpu_custom_call.1} parent=1 // pred_fallthru
      _
    // Predicated region
    $region14: #{tpu_custom_call.1} parent=1 // pred_check
      _
    $region15: #{tpu_custom_call.1} parent=1 // pred_check_branch
      %38 = sbr.rel (0) target = $region17
    $region16: #{tpu_custom_call.1} parent=1 // pred_region
      %39 = dma.done [#allocation3], 256
    $region17: #{tpu_custom_call.1} parent=1 // pred_fallthru
      _
    // Predicated region
    $region18: #{tpu_custom_call.1} parent=1 // pred_check
      _
    $region19: #{tpu_custom_call.1} parent=1 // pred_check_branch
      %41 = sbr.rel (0) target = $region21
    $region20: #{tpu_custom_call.1} parent=1 // pred_region
      %42 = dma.done [#allocation6], 512
    $region21: #{tpu_custom_call.1} parent=1 // pred_fallthru
      _
    %v43 = vld [vmem:[#allocation2] sm:$0xff]
    %v44 = vld [vmem:[#allocation2 + $0x8] sm:$0xff]
    %v45 = vld [vmem:[#allocation5] sm:$0xff]
    %v46 = vld [vmem:[#allocation5 + $0x8] sm:$0xff]
    %v47 = vld [vmem:[#allocation5 + $0x10] sm:$0xff]
    %v48 = vld [vmem:[#allocation5 + $0x18] sm:$0xff]
    %v49 = vld [vmem:[%s2] sm:$0x3]
    %vm50 = vcmask 261120
    %v52 = vsel %vm50, %v43, 0
    %v55 = vsel %vm50, %v44, 0
    %57 = vmatprep.subr.mxu0 0.0
    %58 = vmatpush1.msra.mxu0 %v45
    %59 = vmatprep.subr.mxu0 0.0
    %60 = vmatpush1.msra.mxu0 %v46
    %61 = vmatprep.subr.mxu0 0.0
    %62 = vmatpush1.msra.mxu0 %v47
    %63 = vmatprep.subr.mxu0 0.0
    %64 = vmatpush1.msra.mxu0 %v48
    %65 = vmatprep.subr.mxu0 0.0
    %66 = vmatpush1.msra.mxu0 0.0
    %67 = vmatprep.subr.mxu0 0.0
    %68 = vmatpush1.msra.mxu0 0.0
    %69 = vmatprep.subr.mxu0 0.0
    %70 = vmatpush1.msra.mxu0 0.0
    %71 = vmatprep.subr.mxu0 0.0
    %72 = vmatpush1.msra.mxu0 0.0
    %73 = vmatprep.subr.mxu0 0.0
    %74 = vmatpush1.msra.mxu0 0.0
    %75 = vmatprep.subr.mxu0 0.0
    %76 = vmatpush1.msra.mxu0 0.0
    %77 = vmatprep.subr.mxu0 0.0
    %78 = vmatpush1.msra.mxu0 0.0
    %79 = vmatprep.subr.mxu0 0.0
    %80 = vmatpush1.msra.mxu0 0.0
    %81 = vmatprep.subr.mxu0 0.0
    %82 = vmatpush1.msra.mxu0 0.0
    %83 = vmatprep.subr.mxu0 0.0
    %84 = vmatpush1.msra.mxu0 0.0
    %85 = vmatprep.subr.mxu0 0.0
    %86 = vmatpush1.msra.mxu0 0.0
    %87 = vmatprep.subr.mxu0 0.0
    %88 = vmatpush1.msra.mxu0 0.0
    %89 = vmatprep.subr.mxu0 0.0
    %90 = vmatpush1.msra.mxu0 0.0
    %91 = vmatprep.subr.mxu0 0.0
    %92 = vmatpush1.msra.mxu0 0.0
    %93 = vmatprep.subr.mxu0 0.0
    %94 = vmatpush1.msra.mxu0 0.0
    %95 = vmatprep.subr.mxu0 0.0
    %96 = vmatpush1.msra.mxu0 0.0
    %97 = vmatprep.subr.mxu0 0.0
    %98 = vmatpush1.msra.mxu0 0.0
    %99 = vmatprep.subr.mxu0 0.0
    %100 = vmatpush1.msra.mxu0 0.0
    %101 = vmatprep.subr.mxu0 0.0
    %102 = vmatpush1.msra.mxu0 0.0
    %103 = vmatprep.subr.mxu0 0.0
    %104 = vmatpush1.msra.mxu0 0.0
    %105 = vmatprep.subr.mxu0 0.0
    %106 = vmatpush1.msra.mxu0 0.0
    %107 = vmatprep.subr.mxu0 0.0
    %108 = vmatpush1.msra.mxu0 0.0
    %109 = vmatprep.subr.mxu0 0.0
    %110 = vmatpush1.msra.mxu0 0.0
    %111 = vmatprep.subr.mxu0 0.0
    %112 = vmatpush1.msra.mxu0 0.0
    %113 = vmatprep.subr.mxu0 0.0
    %114 = vmatpush1.msra.mxu0 0.0
    %115 = vmatprep.subr.mxu0 0.0
    %116 = vmatpush1.msra.mxu0 0.0
    %117 = vmatprep.subr.mxu0 0.0
    %118 = vmatpush1.msra.mxu0 0.0
    %119 = vmatprep.subr.mxu0 0.0
    %120 = vmatpush1.msra.mxu0 0.0
    %121 = vmatprep.mubr.f32.mxu0 0.0
    %122 = vmatmul.mubr.f32.gmra.mrb[0].mxu0 %v52
    %v123 = vpop.f32.mrb[0].mxu0
    %v124 = vadd.f32 0.0, %v123
    %v125 = vpop.f32.mrb[0].mxu0
    %126 = vmatprep.mubr.f32.mxu0 0.0
    %127 = vmatmul.mubr.f32.gmra.mrb[0].mxu0 %v55
    %v128 = vpop.f32.mrb[0].mxu0
    %v129 = vadd.f32 0.0, %v128
    %v130 = vpop.f32.mrb[0].mxu0
    %131 = vdwg.mxu0
    %v132 = vlaneseq
    %v133 = vshrl.u32 %v132, 7
    %v134 = vsub.s32 0, %v133
    %v135 = vrot.slane %v49, %v134
    %v136 = vmul.f32 %v43, %v135
    %v137 = vmul.f32 %v44, %v135
    %v138 = vsel %vm50, %v136, 0.0
    %139 = vadd.xlane.f32.xlu0 %v138
    %v140 = vpop.xlane.xlu0 %139
    %v141 = vsel %vm50, %v137, 0.0
    %142 = vadd.xlane.f32.xlu0 %v141
    %v143 = vpop.xlane.xlu0 %142
    %v145 = vrot.slane %v49, 1
    %v146 = vsel %vm50, %v145, 0
    %148 = vmatprep.subr.mxu0 0.0
    %149 = vmatpush1.xpose.msra.mxu0 %v52
    %150 = vmatprep.subr.mxu0 0.0
    %151 = vmatpush1.xpose.msra.mxu0 %v55
    %152 = vmatprep.subr.mxu0 0.0
    %153 = vmatpush1.xpose.msra.mxu0 0.0
    %154 = vmatprep.subr.mxu0 0.0
    %155 = vmatpush1.xpose.msra.mxu0 0.0
    %156 = vmatprep.subr.mxu0 0.0
    %157 = vmatpush1.xpose.msra.mxu0 0.0
    %158 = vmatprep.subr.mxu0 0.0
    %159 = vmatpush1.xpose.msra.mxu0 0.0
    %160 = vmatprep.subr.mxu0 0.0
    %161 = vmatpush1.xpose.msra.mxu0 0.0
    %162 = vmatprep.subr.mxu0 0.0
    %163 = vmatpush1.xpose.msra.mxu0 0.0
    %164 = vmatprep.subr.mxu0 0.0
    %165 = vmatpush1.xpose.msra.mxu0 0.0
    %166 = vmatprep.subr.mxu0 0.0
    %167 = vmatpush1.xpose.msra.mxu0 0.0
    %168 = vmatprep.subr.mxu0 0.0
    %169 = vmatpush1.xpose.msra.mxu0 0.0
    %170 = vmatprep.subr.mxu0 0.0
    %171 = vmatpush1.xpose.msra.mxu0 0.0
    %172 = vmatprep.subr.mxu0 0.0
    %173 = vmatpush1.xpose.msra.mxu0 0.0
    %174 = vmatprep.subr.mxu0 0.0
    %175 = vmatpush1.xpose.msra.mxu0 0.0
    %176 = vmatprep.subr.mxu0 0.0
    %177 = vmatpush1.xpose.msra.mxu0 0.0
    %178 = vmatprep.subr.mxu0 0.0
    %179 = vmatpush1.xpose.msra.mxu0 0.0
    %180 = vmatprep.subr.mxu0 0.0
    %181 = vmatpush1.xpose.msra.mxu0 0.0
    %182 = vmatprep.subr.mxu0 0.0
    %183 = vmatpush1.xpose.msra.mxu0 0.0
    %184 = vmatprep.subr.mxu0 0.0
    %185 = vmatpush1.xpose.msra.mxu0 0.0
    %186 = vmatprep.subr.mxu0 0.0
    %187 = vmatpush1.xpose.msra.mxu0 0.0
    %188 = vmatprep.subr.mxu0 0.0
    %189 = vmatpush1.xpose.msra.mxu0 0.0
    %190 = vmatprep.subr.mxu0 0.0
    %191 = vmatpush1.xpose.msra.mxu0 0.0
    %192 = vmatprep.subr.mxu0 0.0
    %193 = vmatpush1.xpose.msra.mxu0 0.0
    %194 = vmatprep.subr.mxu0 0.0
    %195 = vmatpush1.xpose.msra.mxu0 0.0
    %196 = vmatprep.subr.mxu0 0.0
    %197 = vmatpush1.xpose.msra.mxu0 0.0
    %198 = vmatprep.subr.mxu0 0.0
    %199 = vmatpush1.xpose.msra.mxu0 0.0
    %200 = vmatprep.subr.mxu0 0.0
    %201 = vmatpush1.xpose.msra.mxu0 0.0
    %202 = vmatprep.subr.mxu0 0.0
    %203 = vmatpush1.xpose.msra.mxu0 0.0
    %204 = vmatprep.subr.mxu0 0.0
    %205 = vmatpush1.xpose.msra.mxu0 0.0
    %206 = vmatprep.subr.mxu0 0.0
    %207 = vmatpush1.xpose.msra.mxu0 0.0
    %208 = vmatprep.subr.mxu0 0.0
    %209 = vmatpush1.xpose.msra.mxu0 0.0
    %210 = vmatprep.subr.mxu0 0.0
    %211 = vmatpush1.xpose.msra.mxu0 0.0
    %212 = vmatprep.mubr.f32.mxu0 0.0
    %213 = vmatmul.mubr.f32.gmra.mrb[0].mxu0 %v146
    %v214 = vpop.f32.mrb[0].mxu0
    %v215 = vadd.f32 0.0, %v214
    %v216 = vpop.f32.mrb[0].mxu0
    %217 = vdwg.mxu0
    %v218 = vlaneseq
    %v219 = vshrl.u32 %v218, 7
    %v220 = vsub.s32 0, %v219
    %v221 = vrot.slane %v215, %v220
    %v222 = vadd.f32 %v140, %v221
    %v223 = vmax.f32 %v222, 0.0
    %vm224 = vcmask 64512
    %v225 = vsel %vm224, %v223, -inf
    %226 = vmax.xlane.f32.xlu0 %v225
    %v227 = vpop.xlane.xlu0 %226
    %v228 = vsub.f32 %v223, %v227
    %v229 = vmul.f32 %v228, 1.442695
    %v230 = vpow.pop %v229
    %v231 = vsel %vm224, %v230, 0.0
    %232 = vadd.xlane.f32.xlu0 %v231
    %v233 = vpop.xlane.xlu0 %232
    %v234 = vrcp.pop %v233
    %v235 = vmul.f32 %v233, %v234
    %v236 = vsub.f32 2.0, %v235
    %v237 = vmul.f32 %v234, %v236
    %v239 = vsel %vm224, %v230, 0
    %241 = vmatprep.subr.mxu0 0.0
    %242 = vmatpush1.msra.mxu0 %v124
    %243 = vmatprep.subr.mxu0 0.0
    %244 = vmatpush1.msra.mxu0 0.0
    %245 = vmatprep.subr.mxu0 0.0
    %246 = vmatpush1.msra.mxu0 0.0
    %247 = vmatprep.subr.mxu0 0.0
    %248 = vmatpush1.msra.mxu0 0.0
    %249 = vmatprep.subr.mxu0 0.0
    %250 = vmatpush1.msra.mxu0 0.0
    %251 = vmatprep.subr.mxu0 0.0
    %252 = vmatpush1.msra.mxu0 0.0
    %253 = vmatprep.subr.mxu0 0.0
    %254 = vmatpush1.msra.mxu0 0.0
    %255 = vmatprep.subr.mxu0 0.0
    %256 = vmatpush1.msra.mxu0 0.0
    %257 = vmatprep.subr.mxu0 0.0
    %258 = vmatpush1.msra.mxu0 0.0
    %259 = vmatprep.subr.mxu0 0.0
    %260 = vmatpush1.msra.mxu0 0.0
    %261 = vmatprep.subr.mxu0 0.0
    %262 = vmatpush1.msra.mxu0 0.0
    %263 = vmatprep.subr.mxu0 0.0
    %264 = vmatpush1.msra.mxu0 0.0
    %265 = vmatprep.subr.mxu0 0.0
    %266 = vmatpush1.msra.mxu0 0.0
    %267 = vmatprep.subr.mxu0 0.0
    %268 = vmatpush1.msra.mxu0 0.0
    %269 = vmatprep.subr.mxu0 0.0
    %270 = vmatpush1.msra.mxu0 0.0
    %271 = vmatprep.subr.mxu0 0.0
    %272 = vmatpush1.msra.mxu0 0.0
    %273 = vmatprep.subr.mxu0 0.0
    %274 = vmatpush1.msra.mxu0 0.0
    %275 = vmatprep.subr.mxu0 0.0
    %276 = vmatpush1.msra.mxu0 0.0
    %277 = vmatprep.subr.mxu0 0.0
    %278 = vmatpush1.msra.mxu0 0.0
    %279 = vmatprep.subr.mxu0 0.0
    %280 = vmatpush1.msra.mxu0 0.0
    %281 = vmatprep.subr.mxu0 0.0
    %282 = vmatpush1.msra.mxu0 0.0
    %283 = vmatprep.subr.mxu0 0.0
    %284 = vmatpush1.msra.mxu0 0.0
    %285 = vmatprep.subr.mxu0 0.0
    %286 = vmatpush1.msra.mxu0 0.0
    %287 = vmatprep.subr.mxu0 0.0
    %288 = vmatpush1.msra.mxu0 0.0
    %289 = vmatprep.subr.mxu0 0.0
    %290 = vmatpush1.msra.mxu0 0.0
    %291 = vmatprep.subr.mxu0 0.0
    %292 = vmatpush1.msra.mxu0 0.0
    %293 = vmatprep.subr.mxu0 0.0
    %294 = vmatpush1.msra.mxu0 0.0
    %295 = vmatprep.subr.mxu0 0.0
    %296 = vmatpush1.msra.mxu0 0.0
    %297 = vmatprep.subr.mxu0 0.0
    %298 = vmatpush1.msra.mxu0 0.0
    %299 = vmatprep.subr.mxu0 0.0
    %300 = vmatpush1.msra.mxu0 0.0
    %301 = vmatprep.subr.mxu0 0.0
    %302 = vmatpush1.msra.mxu0 0.0
    %303 = vmatprep.subr.mxu0 0.0
    %304 = vmatpush1.msra.mxu0 0.0
    %305 = vmatprep.mubr.f32.mxu0 0.0
    %306 = vmatmul.mubr.f32.gmra.mrb[0].mxu0 %v239
    %v307 = vpop.f32.mrb[0].mxu0
    %v308 = vadd.f32 0.0, %v307
    %v309 = vpop.f32.mrb[0].mxu0
    %310 = vdwg.mxu0
    %v311 = vmax.f32 %v308, 0.0
    %v312 = vmul.f32 %v311, %v237
    %v313 = vadd.f32 %v143, %v221
    %v314 = vmax.f32 %v313, 0.0
    %vm315 = vcmask 130112
    %v316 = vsel %vm315, %v314, -inf
    %317 = vmax.xlane.f32.xlu0 %v316
    %v318 = vpop.xlane.xlu0 %317
    %v319 = vsub.f32 %v314, %v318
    %v320 = vmul.f32 %v319, 1.442695
    %v321 = vpow.pop %v320
    %323 = vrot.lane.b32.xlu0 %v321, 120
    %v324 = vpop.permute.xlu0 %323
    %v326 = vsel %vm224, %v324, 0.0
    %327 = vadd.xlane.f32.xlu0 %v326
    %v328 = vpop.xlane.xlu0 %327
    %v329 = vrcp.pop %v328
    %v330 = vmul.f32 %v328, %v329
    %v331 = vsub.f32 2.0, %v330
    %v332 = vmul.f32 %v329, %v331
    %v333 = vsel %vm224, %v324, 0
    %335 = vmatprep.subr.mxu0 0.0
    %336 = vmatpush1.msra.mxu0 %v129
    %337 = vmatprep.subr.mxu0 0.0
    %338 = vmatpush1.msra.mxu0 0.0
    %339 = vmatprep.subr.mxu0 0.0
    %340 = vmatpush1.msra.mxu0 0.0
    %341 = vmatprep.subr.mxu0 0.0
    %342 = vmatpush1.msra.mxu0 0.0
    %343 = vmatprep.subr.mxu0 0.0
    %344 = vmatpush1.msra.mxu0 0.0
    %345 = vmatprep.subr.mxu0 0.0
    %346 = vmatpush1.msra.mxu0 0.0
    %347 = vmatprep.subr.mxu0 0.0
    %348 = vmatpush1.msra.mxu0 0.0
    %349 = vmatprep.subr.mxu0 0.0
    %350 = vmatpush1.msra.mxu0 0.0
    %351 = vmatprep.subr.mxu0 0.0
    %352 = vmatpush1.msra.mxu0 0.0
    %353 = vmatprep.subr.mxu0 0.0
    %354 = vmatpush1.msra.mxu0 0.0
    %355 = vmatprep.subr.mxu0 0.0
    %356 = vmatpush1.msra.mxu0 0.0
    %357 = vmatprep.subr.mxu0 0.0
    %358 = vmatpush1.msra.mxu0 0.0
    %359 = vmatprep.subr.mxu0 0.0
    %360 = vmatpush1.msra.mxu0 0.0
    %361 = vmatprep.subr.mxu0 0.0
    %362 = vmatpush1.msra.mxu0 0.0
    %363 = vmatprep.subr.mxu0 0.0
    %364 = vmatpush1.msra.mxu0 0.0
    %365 = vmatprep.subr.mxu0 0.0
    %366 = vmatpush1.msra.mxu0 0.0
    %367 = vmatprep.subr.mxu0 0.0
    %368 = vmatpush1.msra.mxu0 0.0
    %369 = vmatprep.subr.mxu0 0.0
    %370 = vmatpush1.msra.mxu0 0.0
    %371 = vmatprep.subr.mxu0 0.0
    %372 = vmatpush1.msra.mxu0 0.0
    %373 = vmatprep.subr.mxu0 0.0
    %374 = vmatpush1.msra.mxu0 0.0
    %375 = vmatprep.subr.mxu0 0.0
    %376 = vmatpush1.msra.mxu0 0.0
    %377 = vmatprep.subr.mxu0 0.0
    %378 = vmatpush1.msra.mxu0 0.0
    %379 = vmatprep.subr.mxu0 0.0
    %380 = vmatpush1.msra.mxu0 0.0
    %381 = vmatprep.subr.mxu0 0.0
    %382 = vmatpush1.msra.mxu0 0.0
    %383 = vmatprep.subr.mxu0 0.0
    %384 = vmatpush1.msra.mxu0 0.0
    %385 = vmatprep.subr.mxu0 0.0
    %386 = vmatpush1.msra.mxu0 0.0
    %387 = vmatprep.subr.mxu0 0.0
    %388 = vmatpush1.msra.mxu0 0.0
    %389 = vmatprep.subr.mxu0 0.0
    %390 = vmatpush1.msra.mxu0 0.0
    %391 = vmatprep.subr.mxu0 0.0
    %392 = vmatpush1.msra.mxu0 0.0
    %393 = vmatprep.subr.mxu0 0.0
    %394 = vmatpush1.msra.mxu0 0.0
    %395 = vmatprep.subr.mxu0 0.0
    %396 = vmatpush1.msra.mxu0 0.0
    %397 = vmatprep.subr.mxu0 0.0
    %398 = vmatpush1.msra.mxu0 0.0
    %399 = vmatprep.mubr.f32.mxu0 0.0
    %400 = vmatmul.mubr.f32.gmra.mrb[0].mxu0 %v333
    %v401 = vpop.f32.mrb[0].mxu0
    %v402 = vadd.f32 0.0, %v401
    %v403 = vpop.f32.mrb[0].mxu0
    %404 = vdwg.mxu0
    %v405 = vmax.f32 %v402, 0.0
    %v406 = vmul.f32 %v405, %v332
    %408 = vrot.lane.b32.xlu0 %v406, 32
    %v409 = vpop.permute.xlu0 %408
    %v411 = vsel %vm50, %v312, %v409
    %vm412 = vcmask 523264
    %413 = vst.msk [vmem:[#allocation7] sm:$0xff] %vm412, %v411
    // Predicated region
    $region22: #{tpu_custom_call.1} parent=1 // pred_check
      _
    $region23: #{tpu_custom_call.1} parent=1 // pred_check_branch
      %415 = sbr.rel (0) target = $region25
    $region24: #{tpu_custom_call.1} parent=1 // pred_region
      %s417 = ssub.s32 128, 128
      %418 = vsyncadd [#allocation4], %s417
      %s420 = sshll.u32 [#allocation7], 4
      %s421 = int_to_ptr.vmem [resolvable:$true] %s420
      %423 = dma.vmem_to_hbm [thread:$0]  %s421, 128, %s3, [#allocation4]
    $region25: #{tpu_custom_call.1} parent=1 // pred_fallthru
      _
    // Predicated region
    $region26: #{tpu_custom_call.1} parent=1 // pred_check
      _
    $region27: #{tpu_custom_call.1} parent=1 // pred_check_branch
      %425 = sbr.rel (0) target = $region29
    $region28: #{tpu_custom_call.1} parent=1 // pred_region
      %426 = dma.done [#allocation4], 128
    $region29: #{tpu_custom_call.1} parent=1 // pred_fallthru
      _
    %427 = vsyncpa [#allocation3], 1
    %428 = vsyncpa [#allocation6], 1
    %429 = vsyncpa [#allocation4], 1

</llo_original>
